<compile_context>
chip_gen: v7x
topology: tpu7x:2x2x1
jax: 0.10.0
libtpu: 0.0.40
codegen_flags: <defaults>
</compile_context>

<pallas_src>
import functools

import jax
import jax.numpy as jnp
from jax.experimental import pallas as pl
from jax.experimental.pallas import tpu as pltpu


def _fused_affine_kernel(wb_ref, x_ref, o_ref):
    # wb_ref: SMEM (3,) f32  -> [w_eff0, w_eff1, b_eff]
    # x_ref : VMEM (2, TILE) f32, feature-major (row 0 = feature 0, row 1 = feature 1)
    # o_ref : VMEM (1, TILE) f32, lane-dense output
    w0 = wb_ref[0]
    w1 = wb_ref[1]
    b = wb_ref[2]
    x = x_ref[...]                                   # (2, TILE)
    # Pure VPU broadcast-multiply-add; no MXU involvement (K=2 would waste it).
    o_ref[...] = x[0:1, :] * w0 + x[1:2, :] * w1 + b


def _round_up(x, m):
    return ((x + m - 1) // m) * m


@functools.partial(jax.jit, static_argnames=("lane_tile",))
def circle_model_v0(x, w1, b1, w2, b2, *, lane_tile=8192):
    """Forward pass of CircleModelV0 as one Pallas call.

    x : (N, 2) f32, PyTorch (batch, features) layout.
    w1: (5, 2), b1: (5,), w2: (1, 5), b2: (1,)  -- nn.Linear conventions.
    Returns (N, 1) f32, identical semantics to layer_2(layer_1(x)).
    """
    n = x.shape[0]

    # --- Trace-time algebraic fusion of the two linear layers (exact) -------
    w_eff = w1.T.astype(jnp.float32) @ w2.T.astype(jnp.float32)   # (2, 1)
    b_eff = b1.astype(jnp.float32) @ w2.T.astype(jnp.float32) + b2.astype(jnp.float32)  # (1,)
    wb = jnp.concatenate([w_eff[:, 0], b_eff]).astype(jnp.float32)  # (3,) -> SMEM

    # --- Lane-dense, feature-major layout + batch tiling --------------------
    tile = min(_round_up(lane_tile, 128), _round_up(n, 128))  # multiple of 128
    n_pad = _round_up(n, tile)
    num_tiles = n_pad // tile

    x_t = jnp.zeros((2, n_pad), jnp.float32).at[:, :n].set(x.T.astype(jnp.float32))

    out_t = pl.pallas_call(
        _fused_affine_kernel,
        out_shape=jax.ShapeDtypeStruct((1, n_pad), jnp.float32),
        grid=(num_tiles,),
        in_specs=[
            # Fused weights/bias: 3 scalars via the scalar path (no VMEM DMA pair).
            pl.BlockSpec(memory_space=pltpu.MemorySpace.SMEM),
            # x tile: full feature dim (2) x lane-dense batch tile.
            pl.BlockSpec((2, tile), lambda i: (0, i)),
        ],
        out_specs=pl.BlockSpec((1, tile), lambda i: (0, i)),
        compiler_params=pltpu.CompilerParams(
            dimension_semantics=("parallel",),  # v7x: shard batch tiles over 2 TCs
        ),
    )(wb, x_t)

    return out_t[0, :n].reshape(n, 1)


def init_params(key):
    """Deterministic init mimicking nn.Linear's U(-1/sqrt(fan_in), 1/sqrt(fan_in))."""
    k1, k2, k3, k4 = jax.random.split(key, 4)
    bound1 = 1.0 / jnp.sqrt(2.0)   # fan_in = 2
    bound2 = 1.0 / jnp.sqrt(5.0)   # fan_in = 5
    w1 = jax.random.uniform(k1, (5, 2), jnp.float32, -bound1, bound1)
    b1 = jax.random.uniform(k2, (5,), jnp.float32, -bound1, bound1)
    w2 = jax.random.uniform(k3, (1, 5), jnp.float32, -bound2, bound2)
    b2 = jax.random.uniform(k4, (1,), jnp.float32, -bound2, bound2)
    return w1, b1, w2, b2


if __name__ == "__main__":
    key = jax.random.PRNGKey(0)
    k_x, k_x2, k_p = jax.random.split(key, 3)

    w1, b1, w2, b2 = init_params(k_p)

    # Small batch of 2-D "circle" points (in_features=2), single-tile path.
    batch = 8
    x = jax.random.normal(k_x, (batch, 2), dtype=jnp.float32)
    out = jax.block_until_ready(circle_model_v0(x, w1, b1, w2, b2))
    ref = (x @ w1.T + b1) @ w2.T + b2
    assert out.shape == (batch, 1)
    assert jnp.allclose(out, ref, atol=1e-5, rtol=1e-5)

    # Slightly larger, non-multiple-of-tile batch to exercise the grid +
    # padding path (lane_tile forced small so num_tiles > 1).
    batch2 = 300
    x2 = jax.random.normal(k_x2, (batch2, 2), dtype=jnp.float32)
    out2 = jax.block_until_ready(circle_model_v0(x2, w1, b1, w2, b2, lane_tile=128))
    ref2 = (x2 @ w1.T + b1) @ w2.T + b2
    assert out2.shape == (batch2, 1)
    assert jnp.allclose(out2, ref2, atol=1e-5, rtol=1e-5)

    print("KERNEL_OK")
</pallas_src>

<mosaic_0001>
module attributes {stable_mosaic.version = 11 : i64} {
  func.func @_fused_affine_kernel(%arg0: i32, %arg1: memref<3xf32, #tpu.memory_space<smem>>, %arg2: memref<2x128xf32, #tpu.memory_space<vmem>>, %arg3: memref<1x128xf32, #tpu.memory_space<vmem>>) attributes {dimension_semantics = [#tpu.dimension_semantics<parallel>], iteration_bounds = array<i64: 1>, scalar_prefetch = 0 : i64, scratch_operands = 0 : i64, tpu.core_type = #tpu.core_type<tc>, window_params = [{transform_indices = @transform_0, window_bounds = array<i64: 3>}, {transform_indices = @transform_1, window_bounds = array<i64: 2, 128>}, {transform_indices = @transform_2, window_bounds = array<i64: 1, 128>}]} {
    %c0 = arith.constant 0 : index
    %0 = memref.load %arg1[%c0] : memref<3xf32, #tpu.memory_space<smem>>
    %c1 = arith.constant 1 : index
    %1 = memref.load %arg1[%c1] : memref<3xf32, #tpu.memory_space<smem>>
    %c2 = arith.constant 2 : index
    %2 = memref.load %arg1[%c2] : memref<3xf32, #tpu.memory_space<smem>>
    %c0_0 = arith.constant 0 : index
    %c0_1 = arith.constant 0 : index
    %3 = vector.load %arg2[%c0_0, %c0_1] : memref<2x128xf32, #tpu.memory_space<vmem>>, vector<2x128xf32>
    %4 = vector.extract_strided_slice %3 {offsets = [0, 0], sizes = [1, 128], strides = [1, 1]} : vector<2x128xf32> to vector<1x128xf32>
    %5 = vector.broadcast %0 : f32 to vector<1x128xf32>
    %6 = arith.mulf %4, %5 : vector<1x128xf32>
    %7 = vector.extract_strided_slice %3 {offsets = [1, 0], sizes = [1, 128], strides = [1, 1]} : vector<2x128xf32> to vector<1x128xf32>
    %8 = vector.broadcast %1 : f32 to vector<1x128xf32>
    %9 = arith.mulf %7, %8 : vector<1x128xf32>
    %10 = arith.addf %6, %9 : vector<1x128xf32>
    %11 = vector.broadcast %2 : f32 to vector<1x128xf32>
    %12 = arith.addf %10, %11 : vector<1x128xf32>
    %c0_2 = arith.constant 0 : index
    %c0_3 = arith.constant 0 : index
    %13 = vector.load %arg3[%c0_2, %c0_3] : memref<1x128xf32, #tpu.memory_space<vmem>>, vector<1x128xf32>
    tpu.vector_store %arg3[%c0_2, %c0_3], %12 {strides = array<i32>} : memref<1x128xf32, #tpu.memory_space<vmem>>, vector<1x128xf32>,
    return
  }
  func.func @transform_0(%arg0: i32) -> i32 {
    %c0_i32 = arith.constant 0 : i32
    %c0_i32_0 = arith.constant 0 : i32
    return %c0_i32 : i32
  }
  func.func @transform_1(%arg0: i32) -> (i32, i32) {
    %c0_i32 = arith.constant 0 : i32
    %c0_i32_0 = arith.constant 0 : i32
    return %c0_i32, %arg0 : i32, i32
  }
  func.func @transform_2(%arg0: i32) -> (i32, i32) {
    %c0_i32 = arith.constant 0 : i32
    %c0_i32_0 = arith.constant 0 : i32
    return %c0_i32, %arg0 : i32, i32
  }
}

</mosaic_0001>

<llo_original>
// kernel: circle_model_v0.1
$region0: #{circle_model_v0.1}
  #allocation0 [shape = 'u32[]', space=smem, size = 0x4, offset = 0x4, fixed_abs, tag = 'smem constant byte address 0x4 - core index']
  #allocation1 [shape = 'u32[144,128]{1,0:T(1,128)}', space=vmem, size = 0x12000, scoped, tag = 'internal scratch']
  %s0 = inlined_call_operand.vmem [shape: f32[3], index: 0, kind: input, shape index: {}]
  %s1 = inlined_call_operand.vmem [shape: f32[2,128], index: 1, kind: input, shape index: {}]
  %s2 = inlined_call_operand.vmem [shape: f32[1,128], index: 2, kind: output, shape index: {}]
  %s3 = sld [smem:[#allocation0]]
  $region22: #{circle_model_v0.1} parent=0
    _
  %s5 = ssub.s32 1, %s3
  %s6 = scalar_select 0, %s5, %s3
  $region1: #{circle_model_v0.1} parent=0
    #allocation2 [shape = 'u8[512]{0}', space=smem, size = 0x200, scoped, tag = 'input window, operand 0, single buffered']
    #allocation3 [shape = 's32[1]{0}', space=sflag, size = 0x4, scoped, tag = 'scoped memory for circle_model_v0.1']
    %7 = vsyncpa [#allocation3], 0
    // Predicated region
    $region2: #{circle_model_v0.1} parent=1 // pred_check
      _
    $region3: #{circle_model_v0.1} parent=1 // pred_check_branch
      %9 = sbr.rel (0) target = $region5
    $region4: #{circle_model_v0.1} parent=1 // pred_region
      %s11 = ssub.s32 16, 16
      %12 = vsyncadd [#allocation3], %s11
      %s14 = sshll.u32 %s0, 4
      %s15 = int_to_ptr.vmem [resolvable:$true] %s14
      %17 = dma.vmem_to_smem %s15, 16, [#allocation2], [#allocation3]
    $region5: #{circle_model_v0.1} parent=1 // pred_fallthru
      _
    // Predicated region
    $region6: #{circle_model_v0.1} parent=1 // pred_check
      _
    $region7: #{circle_model_v0.1} parent=1 // pred_check_branch
      %19 = sbr.rel (0) target = $region9
    $region8: #{circle_model_v0.1} parent=1 // pred_region
      _
    $region9: #{circle_model_v0.1} parent=1 // pred_fallthru
      _
    // Predicated region
    $region10: #{circle_model_v0.1} parent=1 // pred_check
      _
    $region11: #{circle_model_v0.1} parent=1 // pred_check_branch
      %21 = sbr.rel (0) target = $region13
    $region12: #{circle_model_v0.1} parent=1 // pred_region
      %22 = dma.done [#allocation3], 16
    $region13: #{circle_model_v0.1} parent=1 // pred_fallthru
      _
    %23 = sfence
    %s24 = sld [smem:[#allocation2]]
    %s25 = sld [smem:[#allocation2 + $0x1]]
    %s26 = sld [smem:[#allocation2 + $0x2]]
    %v27 = vld [vmem:[%s1] sm:$0x3]
    %v28 = vstv %s24
    %v29 = vmul.f32 %v27, %v28
    %v30 = vstv %s25
    %v31 = vmul.f32 %v27, %v30
    %v33 = vrot.slane %v31, 1
    %v35 = vadd.f32 %v29, %v33
    %v36 = vstv %s26
    %v37 = vadd.f32 %v35, %v36
    %38 = vst [vmem:[%s2] sm:$0x1] %v37
    // Predicated region
    $region14: #{circle_model_v0.1} parent=1 // pred_check
      _
    $region15: #{circle_model_v0.1} parent=1 // pred_check_branch
      %40 = sbr.rel (0) target = $region17
    $region16: #{circle_model_v0.1} parent=1 // pred_region
      _
    $region17: #{circle_model_v0.1} parent=1 // pred_fallthru
      _
    // Predicated region
    $region18: #{circle_model_v0.1} parent=1 // pred_check
      _
    $region19: #{circle_model_v0.1} parent=1 // pred_check_branch
      %42 = sbr.rel (0) target = $region21
    $region20: #{circle_model_v0.1} parent=1 // pred_region
      _
    $region21: #{circle_model_v0.1} parent=1 // pred_fallthru
      _
    %43 = vsyncpa [#allocation3], 1

</llo_original>
